<compile_context>
chip_gen: v7x
topology: tpu7x:2x2x1
jax: 0.10.0
libtpu: 0.0.40
codegen_flags: <defaults>
</compile_context>

<pallas_src>
import jax
import jax.numpy as jnp
from jax.experimental import pallas as pl
from jax.experimental.pallas import tpu as pltpu


def _round_up(x, m):
    return ((x + m - 1) // m) * m


def _cdiv(a, b):
    return -(-a // b)


def _default_mxu_dtype():
    """bf16 MXU operands on v6e/v7x, f32 elsewhere (v5e has no bf16 VPU)."""
    try:
        kind = jax.devices()[0].device_kind.lower()
    except Exception:
        return jnp.float32
    if "v6" in kind or "v7" in kind:
        return jnp.bfloat16
    return jnp.float32


def tagger_kernel(ids_ref, a_ref, wproj_ref, bproj_ref, out_ref):
    """Fused embed+encode (one matmul, bias folded) -> proj -> greedy argmax.

    Tokens live on the lane axis, so every intermediate is lane-dense, the
    label argmax is a cheap 8-row sublane reduction, and the int32 output is a
    full-width unmasked row store.
    """
    ids = ids_ref[0]                       # (2, TILE) int32
    wids = ids[0:1, :]                     # (1, TILE) word ids
    pids = ids[1:2, :]                     # (1, TILE) pos ids, pre-offset by Vw
    tile = ids.shape[-1]
    vc = a_ref.shape[1]                    # Vw + Vp + 1 (last col = encode bias)
    cdt = a_ref.dtype

    # --- combined one-hot: word row, pos row, and an always-1 bias row -------
    row = jax.lax.broadcasted_iota(jnp.int32, (vc, tile), 0)
    hit = (row == wids) | (row == pids) | (row == vc - 1)
    oh = jnp.where(hit, jnp.ones((), cdt), jnp.zeros((), cdt))        # (Vc, TILE)

    # --- embed + encode + encode-bias in a single MXU push -------------------
    h_t = jnp.tanh(jnp.dot(a_ref[...], oh,
                           preferred_element_type=jnp.float32))       # (H, TILE) f32

    # --- proj: logits over labels (bias pre-broadcast, lane-dense) -----------
    logits_t = (jnp.dot(wproj_ref[...], h_t.astype(cdt),
                        preferred_element_type=jnp.float32)
                + bproj_ref[...])                                      # (L, TILE) f32

    # --- decode: greedy first-index argmax over labels (sublane reduction) ---
    num_labels = logits_t.shape[0]
    max_v = jnp.max(logits_t, axis=0, keepdims=True)                   # (1, TILE)
    lbl = jax.lax.broadcasted_iota(jnp.int32, logits_t.shape, 0)
    cand = jnp.where(logits_t == max_v, lbl, jnp.int32(num_labels))
    out_ref[0] = jnp.min(cand, axis=0, keepdims=True)                  # (1, TILE)


def tagger_pallas(ids, a, w_proj_t, bproj_b):
    num_tiles, _, tile = ids.shape
    h, vc = a.shape
    l, _ = w_proj_t.shape

    const = lambda i: (0, 0)   # tiny resident weights: same block every step
    return pl.pallas_call(
        tagger_kernel,
        out_shape=jax.ShapeDtypeStruct((num_tiles, 1, tile), jnp.int32),
        grid=(num_tiles,),
        in_specs=[
            pl.BlockSpec((1, 2, tile), lambda i: (i, 0, 0)),   # merged word/pos ids
            pl.BlockSpec((h, vc), const),                      # fused embed+enc table
            pl.BlockSpec((l, h), const),                       # w_proj^T
            pl.BlockSpec((l, tile), const),                    # b_proj (lane-dense)
        ],
        out_specs=pl.BlockSpec((1, 1, tile), lambda i: (i, 0, 0)),
        compiler_params=pltpu.CompilerParams(
            dimension_semantics=("parallel",)),
    )(ids, a, w_proj_t, bproj_b)


def _prep_fused_params(params, dtype):
    """A = [ (emb_word @ w_enc[:Ew])^T | (emb_pos @ w_enc[Ew:])^T | b_enc ]."""
    emb_w = params["emb_word"]                 # (Vw, Ew)
    emb_p = params["emb_pos"]                  # (Vp, Ep)
    w_enc = params["w_enc"]                    # (Ew+Ep, H)
    b_enc = params["b_enc"].reshape(-1)        # (H,)
    ew = emb_w.shape[1]
    a_w = (emb_w @ w_enc[:ew]).T               # (H, Vw)
    a_p = (emb_p @ w_enc[ew:]).T               # (H, Vp)
    a = jnp.concatenate([a_w, a_p, b_enc[:, None]], axis=1)     # (H, Vw+Vp+1)
    w_proj_t = params["w_proj"].T              # (L, H)
    return a.astype(dtype), w_proj_t.astype(dtype)


def abstract_encoder_tagger_forward(params, inputs, tile_tokens=8192,
                                    compute_dtype=None):
    """Forward pass: embed -> encode -> proj -> greedy decode (eval mode)."""
    if compute_dtype is None:
        compute_dtype = _default_mxu_dtype()

    word_ids = inputs["word"].astype(jnp.int32)      # (B, T)
    pos_ids = inputs["pos"].astype(jnp.int32)        # (B, T)
    _lengths = inputs["lengths"]  # greedy decoder w/o constraint mask ignores lengths
    B, T = word_ids.shape
    bt = B * T
    vw = params["emb_word"].shape[0]
    num_labels = params["w_proj"].shape[1]

    # Token tile: always a multiple of 128 (lane-dense unmasked stores),
    # as large as possible (up to tile_tokens) to amortize per-step overhead.
    tile = _round_up(min(tile_tokens, bt), 128)
    # v7x megacore: if there is enough work, keep >= 2 grid steps so the
    # "parallel" axis can shard across both TensorCores.
    if tile > 128 and _round_up(bt, tile) // tile < 2:
        tile = _round_up(_cdiv(bt, 2), 128)
    padded_bt = _round_up(bt, tile)
    num_tiles = padded_bt // tile

    # Merge word/pos ids into one array (one DMA per step); pos ids are
    # pre-offset by Vw so they index directly into the fused table.
    ids = jnp.stack([word_ids.reshape(bt), pos_ids.reshape(bt) + vw], axis=0)
    ids = jnp.pad(ids, ((0, 0), (0, padded_bt - bt)))        # pad tokens, sliced off below
    ids = ids.reshape(2, num_tiles, tile).transpose(1, 0, 2)  # (num_tiles, 2, tile)

    a, w_proj_t = _prep_fused_params(params, compute_dtype)
    bproj_b = jnp.broadcast_to(
        params["b_proj"].reshape(-1, 1).astype(jnp.float32), (num_labels, tile))

    path = tagger_pallas(ids, a, w_proj_t, bproj_b)
    return path.reshape(padded_bt)[:bt].reshape(B, T)
    # TODO(synk): CRF / constrained-Viterbi decoder (crf=True / constraint_mask
    # path) not implemented; default TaggerGreedyDecoder without mask == argmax.


def make_params():
    key = jax.random.PRNGKey(0)
    k = jax.random.split(key, 6)
    V_word, V_pos = 32, 12
    Ew, Ep = 16, 16
    E = Ew + Ep          # embeddings 'concat' reduction output dim
    H = 32               # encoder output dim
    L = 8                # number of labels
    params = {
        "emb_word": jax.random.normal(k[0], (V_word, Ew), jnp.float32) * 0.1,
        "emb_pos":  jax.random.normal(k[1], (V_pos, Ep), jnp.float32) * 0.1,
        "w_enc":    jax.random.normal(k[2], (E, H), jnp.float32) * 0.1,
        "b_enc":    jax.random.normal(k[3], (1, H), jnp.float32) * 0.1,
        "w_proj":   jax.random.normal(k[4], (H, L), jnp.float32) * 0.1,
        "b_proj":   jax.random.normal(k[5], (1, L), jnp.float32) * 0.1,
    }
    return params, (V_word, V_pos, L)


def reference_logits(params, inputs):
    """Pure-JAX (f32) reference of the same transduce() pass."""
    e_word = jnp.take(params["emb_word"], inputs["word"], axis=0)
    e_pos = jnp.take(params["emb_pos"], inputs["pos"], axis=0)
    x = jnp.concatenate([e_word, e_pos], axis=-1)
    h = jnp.tanh(x @ params["w_enc"] + params["b_enc"].reshape(-1))
    return h @ params["w_proj"] + params["b_proj"].reshape(-1)


if __name__ == "__main__":
    B, T = 2, 8
    params, (V_word, V_pos, L) = make_params()

    key = jax.random.PRNGKey(0)
    kw, kp = jax.random.split(key)
    inputs = {
        "word": jax.random.randint(kw, (B, T), 1, V_word, dtype=jnp.int32),
        "pos":  jax.random.randint(kp, (B, T), 1, V_pos, dtype=jnp.int32),
        "lengths": jnp.array([T, T - 2], dtype=jnp.int32),
    }

    path = abstract_encoder_tagger_forward(params, inputs)
    path = jax.block_until_ready(path)

    assert path.shape == (B, T) and path.dtype == jnp.int32
    assert bool(jnp.all((path >= 0) & (path < L)))

    # Validate against the f32 reference.  The kernel may use bf16 MXU operands
    # (v6e/v7x), so instead of demanding bit-identical argmax under near-ties,
    # require the chosen label's reference logit to be within a tight tolerance
    # of the reference maximum (exact match whenever no near-tie exists).
    ref_logits = jax.block_until_ready(reference_logits(params, inputs))
    chosen = jnp.take_along_axis(ref_logits, path[..., None], axis=-1)[..., 0]
    gap = ref_logits.max(axis=-1) - chosen
    assert bool(jnp.all(gap <= 5e-3)), gap

    print("KERNEL_OK")
</pallas_src>

<mosaic_0001>
module attributes {stable_mosaic.version = 11 : i64} {
  func.func @tagger_kernel(%arg0: i32, %arg1: memref<1x2x128xi32, #tpu.memory_space<vmem>>, %arg2: memref<32x45xf32, #tpu.memory_space<vmem>>, %arg3: memref<8x32xf32, #tpu.memory_space<vmem>>, %arg4: memref<8x128xf32, #tpu.memory_space<vmem>>, %arg5: memref<1x1x128xi32, #tpu.memory_space<vmem>>) attributes {dimension_semantics = [#tpu.dimension_semantics<parallel>], iteration_bounds = array<i64: 1>, scalar_prefetch = 0 : i64, scratch_operands = 0 : i64, tpu.core_type = #tpu.core_type<tc>, window_params = [{transform_indices = @transform_0, window_bounds = array<i64: 1, 2, 128>}, {pipeline_mode = #tpu.pipeline_mode<synchronous>, transform_indices = @transform_1, window_bounds = array<i64: 32, 45>}, {pipeline_mode = #tpu.pipeline_mode<synchronous>, transform_indices = @transform_2, window_bounds = array<i64: 8, 32>}, {pipeline_mode = #tpu.pipeline_mode<synchronous>, transform_indices = @transform_3, window_bounds = array<i64: 8, 128>}, {transform_indices = @transform_4, window_bounds = array<i64: 1, 1, 128>}]} {
    %c0 = arith.constant 0 : index
    %c0_0 = arith.constant 0 : index
    %c0_1 = arith.constant 0 : index
    %0 = vector.load %arg1[%c0, %c0_0, %c0_1] : memref<1x2x128xi32, #tpu.memory_space<vmem>>, vector<1x2x128xi32>
    %1 = vector.shape_cast %0 : vector<1x2x128xi32> to vector<2x128xi32>
    %2 = vector.extract_strided_slice %1 {offsets = [0, 0], sizes = [1, 128], strides = [1, 1]} : vector<2x128xi32> to vector<1x128xi32>
    %3 = vector.extract_strided_slice %1 {offsets = [1, 0], sizes = [1, 128], strides = [1, 1]} : vector<2x128xi32> to vector<1x128xi32>
    %4 = tpu.iota {dimensions = array<i32: 0>} : vector<45x128xi32>
    %5 = vector.broadcast %2 : vector<1x128xi32> to vector<45x128xi32>
    %6 = arith.cmpi eq, %4, %5 : vector<45x128xi32>
    %7 = vector.broadcast %3 : vector<1x128xi32> to vector<45x128xi32>
    %8 = arith.cmpi eq, %4, %7 : vector<45x128xi32>
    %9 = arith.ori %6, %8 : vector<45x128xi1>
    %c44_i32 = arith.constant 44 : i32
    %10 = vector.broadcast %c44_i32 : i32 to vector<45x128xi32>
    %11 = arith.cmpi eq, %4, %10 : vector<45x128xi32>
    %12 = arith.ori %9, %11 : vector<45x128xi1>
    %cst = arith.constant 1.000000e+00 : f32
    %cst_2 = arith.constant 0.000000e+00 : f32
    %13 = vector.broadcast %cst : f32 to vector<45x128xf32>
    %14 = vector.broadcast %cst_2 : f32 to vector<45x128xf32>
    %15 = arith.select %12, %13, %14 : vector<45x128xi1>, vector<45x128xf32>
    %c0_3 = arith.constant 0 : index
    %c0_4 = arith.constant 0 : index
    %16 = vector.load %arg2[%c0_3, %c0_4] : memref<32x45xf32, #tpu.memory_space<vmem>>, vector<32x45xf32>
    %cst_5 = arith.constant dense<0.000000e+00> : vector<32x128xf32>
    %17 = tpu.matmul %16, %15, %cst_5 {dimension_numbers = #tpu.dot_dimension_numbers<[1], [0], [0], [1], [0, 0, 1, 1], [], []>} : vector<32x45xf32>, vector<45x128xf32>, vector<32x128xf32> -> vector<32x128xf32>
    %18 = math.tanh %17 : vector<32x128xf32>
    %c0_6 = arith.constant 0 : index
    %c0_7 = arith.constant 0 : index
    %19 = vector.load %arg3[%c0_6, %c0_7] : memref<8x32xf32, #tpu.memory_space<vmem>>, vector<8x32xf32>
    %cst_8 = arith.constant dense<0.000000e+00> : vector<8x128xf32>
    %20 = tpu.matmul %19, %18, %cst_8 {dimension_numbers = #tpu.dot_dimension_numbers<[1], [0], [0], [1], [0, 0, 1, 1], [], []>} : vector<8x32xf32>, vector<32x128xf32>, vector<8x128xf32> -> vector<8x128xf32>
    %c0_9 = arith.constant 0 : index
    %c0_10 = arith.constant 0 : index
    %21 = vector.load %arg4[%c0_9, %c0_10] : memref<8x128xf32, #tpu.memory_space<vmem>>, vector<8x128xf32>
    %22 = arith.addf %20, %21 : vector<8x128xf32>
    %cst_11 = arith.constant dense<0xFF800000> : vector<128xf32>
    %23 = vector.multi_reduction <maximumf>, %22, %cst_11 [0] : vector<8x128xf32> to vector<128xf32>
    %24 = vector.shape_cast %23 : vector<128xf32> to vector<1x128xf32>
    %25 = tpu.iota {dimensions = array<i32: 0>} : vector<8x128xi32>
    %26 = vector.broadcast %24 : vector<1x128xf32> to vector<8x128xf32>
    %27 = arith.cmpf oeq, %22, %26 : vector<8x128xf32>
    %c8_i32 = arith.constant 8 : i32
    %28 = vector.broadcast %c8_i32 : i32 to vector<8x128xi32>
    %29 = arith.select %27, %25, %28 : vector<8x128xi1>, vector<8x128xi32>
    %cst_12 = arith.constant dense<2147483647> : vector<128xi32>
    %30 = vector.multi_reduction <minsi>, %29, %cst_12 [0] : vector<8x128xi32> to vector<128xi32>
    %31 = vector.shape_cast %30 : vector<128xi32> to vector<1x128xi32>
    %c0_13 = arith.constant 0 : index
    %c0_14 = arith.constant 0 : index
    %c0_15 = arith.constant 0 : index
    %32 = vector.load %arg5[%c0_13, %c0_14, %c0_15] : memref<1x1x128xi32, #tpu.memory_space<vmem>>, vector<1x1x128xi32>
    %33 = vector.shape_cast %32 : vector<1x1x128xi32> to vector<1x128xi32>
    %34 = vector.shape_cast %31 : vector<1x128xi32> to vector<1x1x128xi32>
    tpu.vector_store %arg5[%c0_13, %c0_14, %c0_15], %34 {strides = array<i32>} : memref<1x1x128xi32, #tpu.memory_space<vmem>>, vector<1x1x128xi32>,
    return
  }
  func.func @transform_0(%arg0: i32) -> (i32, i32, i32) {
    %c0_i32 = arith.constant 0 : i32
    %c0_i32_0 = arith.constant 0 : i32
    %c0_i32_1 = arith.constant 0 : i32
    return %arg0, %c0_i32, %c0_i32_0 : i32, i32, i32
  }
  func.func @transform_1(%arg0: i32) -> (i32, i32) {
    %c0_i32 = arith.constant 0 : i32
    %c0_i32_0 = arith.constant 0 : i32
    %c0_i32_1 = arith.constant 0 : i32
    return %c0_i32, %c0_i32_0 : i32, i32
  }
  func.func @transform_2(%arg0: i32) -> (i32, i32) {
    %c0_i32 = arith.constant 0 : i32
    %c0_i32_0 = arith.constant 0 : i32
    %c0_i32_1 = arith.constant 0 : i32
    return %c0_i32, %c0_i32_0 : i32, i32
  }
  func.func @transform_3(%arg0: i32) -> (i32, i32) {
    %c0_i32 = arith.constant 0 : i32
    %c0_i32_0 = arith.constant 0 : i32
    %c0_i32_1 = arith.constant 0 : i32
    return %c0_i32, %c0_i32_0 : i32, i32
  }
  func.func @transform_4(%arg0: i32) -> (i32, i32, i32) {
    %c0_i32 = arith.constant 0 : i32
    %c0_i32_0 = arith.constant 0 : i32
    %c0_i32_1 = arith.constant 0 : i32
    return %arg0, %c0_i32, %c0_i32_0 : i32, i32, i32
  }
}

</mosaic_0001>

<llo_original>
// kernel: tpu_custom_call.1
$region0: #{tpu_custom_call.1}
  #allocation0 [shape = 'u32[]', space=smem, size = 0x4, offset = 0x4, fixed_abs, tag = 'smem constant byte address 0x4 - core index']
  #allocation1 [shape = 'u32[144,128]{1,0:T(1,128)}', space=vmem, size = 0x12000, scoped, tag = 'internal scratch']
  %s0 = inlined_call_operand.hbm [shape: s32[1,2,128], index: 0, kind: input, shape index: {}]
  %s1 = inlined_call_operand.hbm [shape: f32[32,45], index: 1, kind: input, shape index: {}]
  %s2 = inlined_call_operand.hbm [shape: f32[8,32], index: 2, kind: input, shape index: {}]
  %s3 = inlined_call_operand.vmem [shape: f32[8,128], index: 3, kind: input, shape index: {}]
  %s4 = inlined_call_operand.hbm [shape: s32[1,1,128], index: 4, kind: output, shape index: {}]
  %s5 = sld [smem:[#allocation0]]
  $region38: #{tpu_custom_call.1} parent=0
    _
  %s7 = ssub.s32 1, %s5
  %s8 = scalar_select 0, %s7, %s5
  $region1: #{tpu_custom_call.1} parent=0
    #allocation2 [shape = 'u8[1024]{0}', space=vmem, size = 0x400, scoped, tag = 'input window, operand 0, single buffered']
    #allocation3 [shape = 's32[1]{0}', space=sflag, size = 0x4, scoped, tag = 'scoped memory for tpu_custom_call.1']
    #allocation4 [shape = 's32[1]{0}', space=sflag, size = 0x4, scoped, tag = 'scoped memory for tpu_custom_call.1']
    #allocation5 [shape = 'u8[16384]{0}', space=vmem, size = 0x4000, scoped, tag = 'input window, operand 1, single buffered']
    #allocation6 [shape = 's32[1]{0}', space=sflag, size = 0x4, scoped, tag = 'scoped memory for tpu_custom_call.1']
    #allocation7 [shape = 'u8[4096]{0}', space=vmem, size = 0x1000, scoped, tag = 'input window, operand 2, single buffered']
    #allocation8 [shape = 'u8[512]{0}', space=vmem, size = 0x400, scoped, tag = 'output window, operand 0, single buffered']
    %9 = vsyncpa [#allocation3], 0
    %10 = vsyncpa [#allocation6], 0
    %11 = vsyncpa [#allocation4], 0
    // Predicated region
    $region2: #{tpu_custom_call.1} parent=1 // pred_check
      _
    $region3: #{tpu_custom_call.1} parent=1 // pred_check_branch
      %13 = sbr.rel (0) target = $region5
    $region4: #{tpu_custom_call.1} parent=1 // pred_region
      %s15 = ssub.s32 32, 32
      %16 = vsyncadd [#allocation3], %s15
      %s18 = sshll.u32 [#allocation2], 4
      %s19 = int_to_ptr.vmem [resolvable:$true] %s18
      %21 = dma.hbm_to_vmem [thread:$0]  %s0, 32, %s19, [#allocation3]
    $region5: #{tpu_custom_call.1} parent=1 // pred_fallthru
      _
    // Predicated region
    $region6: #{tpu_custom_call.1} parent=1 // pred_check
      _
    $region7: #{tpu_custom_call.1} parent=1 // pred_check_branch
      %23 = sbr.rel (0) target = $region9
    $region8: #{tpu_custom_call.1} parent=1 // pred_region
      %s25 = ssub.s32 512, 512
      %26 = vsyncadd [#allocation6], %s25
      %s27 = sshll.u32 [#allocation5], 4
      %s28 = int_to_ptr.vmem [resolvable:$true] %s27
      %33 = dma.hbm_to_vmem [thread:$0]  %s1, 512, %s28, [#allocation6], 128, 128, 8
    $region9: #{tpu_custom_call.1} parent=1 // pred_fallthru
      _
    // Predicated region
    $region10: #{tpu_custom_call.1} parent=1 // pred_check
      _
    $region11: #{tpu_custom_call.1} parent=1 // pred_check_branch
      %35 = sbr.rel (0) target = $region13
    $region12: #{tpu_custom_call.1} parent=1 // pred_region
      %s37 = ssub.s32 128, 128
      %38 = vsyncadd [#allocation6], %s37
      %s40 = sshll.u32 [#allocation7], 4
      %s41 = int_to_ptr.vmem [resolvable:$true] %s40
      %43 = dma.hbm_to_vmem [thread:$0]  %s2, 128, %s41, [#allocation6]
    $region13: #{tpu_custom_call.1} parent=1 // pred_fallthru
      _
    // Predicated region
    $region14: #{tpu_custom_call.1} parent=1 // pred_check
      _
    $region15: #{tpu_custom_call.1} parent=1 // pred_check_branch
      %45 = sbr.rel (0) target = $region17
    $region16: #{tpu_custom_call.1} parent=1 // pred_region
      _
    $region17: #{tpu_custom_call.1} parent=1 // pred_fallthru
      _
    // Predicated region
    $region18: #{tpu_custom_call.1} parent=1 // pred_check
      _
    $region19: #{tpu_custom_call.1} parent=1 // pred_check_branch
      %47 = sbr.rel (0) target = $region21
    $region20: #{tpu_custom_call.1} parent=1 // pred_region
      %48 = dma.done [#allocation3], 32
    $region21: #{tpu_custom_call.1} parent=1 // pred_fallthru
      _
    // Predicated region
    $region22: #{tpu_custom_call.1} parent=1 // pred_check
      _
    $region23: #{tpu_custom_call.1} parent=1 // pred_check_branch
      %50 = sbr.rel (0) target = $region25
    $region24: #{tpu_custom_call.1} parent=1 // pred_region
      %51 = dma.done [#allocation6], 512
    $region25: #{tpu_custom_call.1} parent=1 // pred_fallthru
      _
    // Predicated region
    $region26: #{tpu_custom_call.1} parent=1 // pred_check
      _
    $region27: #{tpu_custom_call.1} parent=1 // pred_check_branch
      %53 = sbr.rel (0) target = $region29
    $region28: #{tpu_custom_call.1} parent=1 // pred_region
      %54 = dma.done [#allocation6], 128
    $region29: #{tpu_custom_call.1} parent=1 // pred_fallthru
      _
    %v55 = vld [vmem:[#allocation2] sm:$0x3]
    %v56 = vlaneseq
    %v57 = vshrl.u32 %v56, 7
    %v58 = vadd.s32 %v57, 8
    %v59 = vadd.s32 %v57, 16
    %v60 = vadd.s32 %v57, 24
    %v61 = vadd.s32 %v57, 32
    %v62 = vadd.s32 %v57, 40
    %v63 = vlaneseq
    %v64 = vshrl.u32 %v63, 7
    %v65 = vsub.s32 0, %v64
    %v66 = vrot.slane %v55, %v65
    %vm67 = vcmp.eq.s32.totalorder %v57, %v66
    %vm68 = vcmp.eq.s32.totalorder %v58, %v66
    %vm69 = vcmp.eq.s32.totalorder %v59, %v66
    %vm70 = vcmp.eq.s32.totalorder %v60, %v66
    %vm71 = vcmp.eq.s32.totalorder %v61, %v66
    %vm72 = vcmp.eq.s32.totalorder %v62, %v66
    %v73 = vlaneseq
    %v74 = vshrl.u32 %v73, 7
    %v75 = vsub.s32 1, %v74
    %v76 = vrot.slane %v55, %v75
    %vm77 = vcmp.eq.s32.totalorder %v57, %v76
    %vm78 = vcmp.eq.s32.totalorder %v58, %v76
    %vm79 = vcmp.eq.s32.totalorder %v59, %v76
    %vm80 = vcmp.eq.s32.totalorder %v60, %v76
    %vm81 = vcmp.eq.s32.totalorder %v61, %v76
    %vm82 = vcmp.eq.s32.totalorder %v62, %v76
    %vm83 = vmor %vm67, %vm77
    %vm84 = vmor %vm68, %vm78
    %vm85 = vmor %vm69, %vm79
    %vm86 = vmor %vm70, %vm80
    %vm87 = vmor %vm71, %vm81
    %vm88 = vmor %vm72, %vm82
    %vm89 = vcmp.eq.s32.totalorder %v57, 44
    %vm90 = vcmp.eq.s32.totalorder %v58, 44
    %vm91 = vcmp.eq.s32.totalorder %v59, 44
    %vm92 = vcmp.eq.s32.totalorder %v60, 44
    %vm93 = vcmp.eq.s32.totalorder %v61, 44
    %vm94 = vcmp.eq.s32.totalorder %v62, 44
    %vm95 = vmor %vm83, %vm89
    %vm96 = vmor %vm84, %vm90
    %vm97 = vmor %vm85, %vm91
    %vm98 = vmor %vm86, %vm92
    %vm99 = vmor %vm87, %vm93
    %vm100 = vmor %vm88, %vm94
    %v101 = vsel %vm95, 1.0, 0.0
    %v102 = vsel %vm96, 1.0, 0.0
    %v103 = vsel %vm97, 1.0, 0.0
    %v104 = vsel %vm98, 1.0, 0.0
    %v105 = vsel %vm99, 1.0, 0.0
    %v106 = vsel %vm100, 1.0, 0.0
    %v107 = vld [vmem:[#allocation5] sm:$0xff]
    %v108 = vld [vmem:[#allocation5 + $0x8] sm:$0xff]
    %v109 = vld [vmem:[#allocation5 + $0x10] sm:$0xff]
    %v110 = vld [vmem:[#allocation5 + $0x18] sm:$0xff]
    %vm111 = vcmask 367616
    %v113 = vsel %vm111, %v107, 0
    %v116 = vsel %vm111, %v108, 0
    %v119 = vsel %vm111, %v109, 0
    %v122 = vsel %vm111, %v110, 0
    %vm124 = vcmask 1044480
    %v126 = vsel %vm124, %v106, 0
    %128 = vmatprep.subr.mxu0 0.0
    %129 = vmatpush1.msra.mxu0 %v101
    %130 = vmatprep.subr.mxu0 0.0
    %131 = vmatpush1.msra.mxu0 %v102
    %132 = vmatprep.subr.mxu0 0.0
    %133 = vmatpush1.msra.mxu0 %v103
    %134 = vmatprep.subr.mxu0 0.0
    %135 = vmatpush1.msra.mxu0 %v104
    %136 = vmatprep.subr.mxu0 0.0
    %137 = vmatpush1.msra.mxu0 %v105
    %138 = vmatprep.subr.mxu0 0.0
    %139 = vmatpush1.msra.mxu0 %v126
    %140 = vmatprep.subr.mxu0 0.0
    %141 = vmatpush1.msra.mxu0 0.0
    %142 = vmatprep.subr.mxu0 0.0
    %143 = vmatpush1.msra.mxu0 0.0
    %144 = vmatprep.subr.mxu0 0.0
    %145 = vmatpush1.msra.mxu0 0.0
    %146 = vmatprep.subr.mxu0 0.0
    %147 = vmatpush1.msra.mxu0 0.0
    %148 = vmatprep.subr.mxu0 0.0
    %149 = vmatpush1.msra.mxu0 0.0
    %150 = vmatprep.subr.mxu0 0.0
    %151 = vmatpush1.msra.mxu0 0.0
    %152 = vmatprep.subr.mxu0 0.0
    %153 = vmatpush1.msra.mxu0 0.0
    %154 = vmatprep.subr.mxu0 0.0
    %155 = vmatpush1.msra.mxu0 0.0
    %156 = vmatprep.subr.mxu0 0.0
    %157 = vmatpush1.msra.mxu0 0.0
    %158 = vmatprep.subr.mxu0 0.0
    %159 = vmatpush1.msra.mxu0 0.0
    %160 = vmatprep.subr.mxu0 0.0
    %161 = vmatpush1.msra.mxu0 0.0
    %162 = vmatprep.subr.mxu0 0.0
    %163 = vmatpush1.msra.mxu0 0.0
    %164 = vmatprep.subr.mxu0 0.0
    %165 = vmatpush1.msra.mxu0 0.0
    %166 = vmatprep.subr.mxu0 0.0
    %167 = vmatpush1.msra.mxu0 0.0
    %168 = vmatprep.subr.mxu0 0.0
    %169 = vmatpush1.msra.mxu0 0.0
    %170 = vmatprep.subr.mxu0 0.0
    %171 = vmatpush1.msra.mxu0 0.0
    %172 = vmatprep.subr.mxu0 0.0
    %173 = vmatpush1.msra.mxu0 0.0
    %174 = vmatprep.subr.mxu0 0.0
    %175 = vmatpush1.msra.mxu0 0.0
    %176 = vmatprep.subr.mxu0 0.0
    %177 = vmatpush1.msra.mxu0 0.0
    %178 = vmatprep.subr.mxu0 0.0
    %179 = vmatpush1.msra.mxu0 0.0
    %180 = vmatprep.subr.mxu0 0.0
    %181 = vmatpush1.msra.mxu0 0.0
    %182 = vmatprep.subr.mxu0 0.0
    %183 = vmatpush1.msra.mxu0 0.0
    %184 = vmatprep.subr.mxu0 0.0
    %185 = vmatpush1.msra.mxu0 0.0
    %186 = vmatprep.subr.mxu0 0.0
    %187 = vmatpush1.msra.mxu0 0.0
    %188 = vmatprep.subr.mxu0 0.0
    %189 = vmatpush1.msra.mxu0 0.0
    %190 = vmatprep.subr.mxu0 0.0
    %191 = vmatpush1.msra.mxu0 0.0
    %192 = vmatprep.mubr.f32.mxu0 0.0
    %193 = vmatmul.mubr.f32.gmra.mrb[0].mxu0 %v113
    %v194 = vpop.f32.mrb[0].mxu0
    %v195 = vadd.f32 0.0, %v194
    %v196 = vpop.f32.mrb[0].mxu0
    %197 = vmatprep.mubr.f32.mxu0 0.0
    %198 = vmatmul.mubr.f32.gmra.mrb[0].mxu0 %v116
    %v199 = vpop.f32.mrb[0].mxu0
    %v200 = vadd.f32 0.0, %v199
    %v201 = vpop.f32.mrb[0].mxu0
    %202 = vmatprep.mubr.f32.mxu0 0.0
    %203 = vmatmul.mubr.f32.gmra.mrb[0].mxu0 %v119
    %v204 = vpop.f32.mrb[0].mxu0
    %v205 = vadd.f32 0.0, %v204
    %v206 = vpop.f32.mrb[0].mxu0
    %207 = vmatprep.mubr.f32.mxu0 0.0
    %208 = vmatmul.mubr.f32.gmra.mrb[0].mxu0 %v122
    %v209 = vpop.f32.mrb[0].mxu0
    %v210 = vadd.f32 0.0, %v209
    %v211 = vpop.f32.mrb[0].mxu0
    %212 = vdwg.mxu0
    %v213 = vtanh.pop %v195
    %v214 = vtanh.pop %v200
    %v215 = vtanh.pop %v205
    %v216 = vtanh.pop %v210
    %v217 = vld [vmem:[#allocation7] sm:$0xff]
    %v218 = vld [vmem:[%s3] sm:$0xff]
    %vm219 = vcmask 261120
    %v221 = vsel %vm219, %v217, 0
    %223 = vmatprep.subr.mxu0 0.0
    %224 = vmatpush1.msra.mxu0 %v213
    %225 = vmatprep.subr.mxu0 0.0
    %226 = vmatpush1.msra.mxu0 %v214
    %227 = vmatprep.subr.mxu0 0.0
    %228 = vmatpush1.msra.mxu0 %v215
    %229 = vmatprep.subr.mxu0 0.0
    %230 = vmatpush1.msra.mxu0 %v216
    %231 = vmatprep.subr.mxu0 0.0
    %232 = vmatpush1.msra.mxu0 0.0
    %233 = vmatprep.subr.mxu0 0.0
    %234 = vmatpush1.msra.mxu0 0.0
    %235 = vmatprep.subr.mxu0 0.0
    %236 = vmatpush1.msra.mxu0 0.0
    %237 = vmatprep.subr.mxu0 0.0
    %238 = vmatpush1.msra.mxu0 0.0
    %239 = vmatprep.subr.mxu0 0.0
    %240 = vmatpush1.msra.mxu0 0.0
    %241 = vmatprep.subr.mxu0 0.0
    %242 = vmatpush1.msra.mxu0 0.0
    %243 = vmatprep.subr.mxu0 0.0
    %244 = vmatpush1.msra.mxu0 0.0
    %245 = vmatprep.subr.mxu0 0.0
    %246 = vmatpush1.msra.mxu0 0.0
    %247 = vmatprep.subr.mxu0 0.0
    %248 = vmatpush1.msra.mxu0 0.0
    %249 = vmatprep.subr.mxu0 0.0
    %250 = vmatpush1.msra.mxu0 0.0
    %251 = vmatprep.subr.mxu0 0.0
    %252 = vmatpush1.msra.mxu0 0.0
    %253 = vmatprep.subr.mxu0 0.0
    %254 = vmatpush1.msra.mxu0 0.0
    %255 = vmatprep.subr.mxu0 0.0
    %256 = vmatpush1.msra.mxu0 0.0
    %257 = vmatprep.subr.mxu0 0.0
    %258 = vmatpush1.msra.mxu0 0.0
    %259 = vmatprep.subr.mxu0 0.0
    %260 = vmatpush1.msra.mxu0 0.0
    %261 = vmatprep.subr.mxu0 0.0
    %262 = vmatpush1.msra.mxu0 0.0
    %263 = vmatprep.subr.mxu0 0.0
    %264 = vmatpush1.msra.mxu0 0.0
    %265 = vmatprep.subr.mxu0 0.0
    %266 = vmatpush1.msra.mxu0 0.0
    %267 = vmatprep.subr.mxu0 0.0
    %268 = vmatpush1.msra.mxu0 0.0
    %269 = vmatprep.subr.mxu0 0.0
    %270 = vmatpush1.msra.mxu0 0.0
    %271 = vmatprep.subr.mxu0 0.0
    %272 = vmatpush1.msra.mxu0 0.0
    %273 = vmatprep.subr.mxu0 0.0
    %274 = vmatpush1.msra.mxu0 0.0
    %275 = vmatprep.subr.mxu0 0.0
    %276 = vmatpush1.msra.mxu0 0.0
    %277 = vmatprep.subr.mxu0 0.0
    %278 = vmatpush1.msra.mxu0 0.0
    %279 = vmatprep.subr.mxu0 0.0
    %280 = vmatpush1.msra.mxu0 0.0
    %281 = vmatprep.subr.mxu0 0.0
    %282 = vmatpush1.msra.mxu0 0.0
    %283 = vmatprep.subr.mxu0 0.0
    %284 = vmatpush1.msra.mxu0 0.0
    %285 = vmatprep.subr.mxu0 0.0
    %286 = vmatpush1.msra.mxu0 0.0
    %287 = vmatprep.mubr.f32.mxu0 0.0
    %288 = vmatmul.mubr.f32.gmra.mrb[0].mxu0 %v221
    %v289 = vpop.f32.mrb[0].mxu0
    %v290 = vadd.f32 %v218, %v289
    %v291 = vpop.f32.mrb[0].mxu0
    %292 = vdwg.mxu0
    %v293 = vrot.slane %v290, 4
    %v294 = vmax.f32 %v290, %v293
    %v295 = vrot.slane %v294, 2
    %v296 = vmax.f32 %v294, %v295
    %v297 = vrot.slane %v296, 1
    %v298 = vmax.f32 %v296, %v297
    %vm299 = vcmp.eq.f32.partialorder %v290, %v298
    %v300 = vsel %vm299, %v57, 8
    %v301 = vrot.slane %v300, 4
    %vm302 = vcmp.lt.s32.totalorder %v300, %v301
    %v303 = vsel %vm302, %v300, %v301
    %v304 = vrot.slane %v303, 2
    %vm305 = vcmp.lt.s32.totalorder %v303, %v304
    %v306 = vsel %vm305, %v303, %v304
    %v307 = vrot.slane %v306, 1
    %vm308 = vcmp.lt.s32.totalorder %v306, %v307
    %v309 = vsel %vm308, %v306, %v307
    %310 = vst [vmem:[#allocation8] sm:$0x1] %v309
    // Predicated region
    $region30: #{tpu_custom_call.1} parent=1 // pred_check
      _
    $region31: #{tpu_custom_call.1} parent=1 // pred_check_branch
      %312 = sbr.rel (0) target = $region33
    $region32: #{tpu_custom_call.1} parent=1 // pred_region
      %s314 = ssub.s32 16, 16
      %315 = vsyncadd [#allocation4], %s314
      %s317 = sshll.u32 [#allocation8], 4
      %s318 = int_to_ptr.vmem [resolvable:$true] %s317
      %320 = dma.vmem_to_hbm [thread:$0]  %s318, 16, %s4, [#allocation4]
    $region33: #{tpu_custom_call.1} parent=1 // pred_fallthru
      _
    // Predicated region
    $region34: #{tpu_custom_call.1} parent=1 // pred_check
      _
    $region35: #{tpu_custom_call.1} parent=1 // pred_check_branch
      %322 = sbr.rel (0) target = $region37
    $region36: #{tpu_custom_call.1} parent=1 // pred_region
      %323 = dma.done [#allocation4], 16
    $region37: #{tpu_custom_call.1} parent=1 // pred_fallthru
      _
    %324 = vsyncpa [#allocation3], 1
    %325 = vsyncpa [#allocation6], 1
    %326 = vsyncpa [#allocation4], 1

</llo_original>
